<compile_context>
chip_gen: v6e
topology: v6e:2x2x1
jax: 0.10.0
libtpu: 0.0.40
codegen_flags: <defaults>
</compile_context>

<pallas_src>
import functools

import jax
import jax.numpy as jnp
from jax import lax
from jax.experimental import pallas as pl
from jax.experimental.pallas import tpu as pltpu

ALPHA = 0.25
GAMMA = 2.0
IGNORE_INDEX = -100.0

_LANES = 128
_SUBLANES = 8
_TILE_ELEMS = _SUBLANES * _LANES          # 1024
_MAX_TILE_ROWS = 8192                     # 8192*128*4B = 4 MiB per input block
_NUM_SPLITS = 2                           # leading "parallel" axis (v7x: 2 TCs)


def _bce_with_logits(x, y):
    # Numerically-stable BCE with logits (same formula PyTorch uses):
    #   max(x, 0) - x*y + log(1 + exp(-|x|))
    return jnp.maximum(x, 0.0) - x * y + jnp.log1p(jnp.exp(-jnp.abs(x)))


def _focal_partial_kernel(preds_ref, labels_ref, sum_ref, cnt_ref, *,
                          ignore_index, rows, block_rows, total_blocks,
                          steps_per_split, ragged, has_pad_steps):
    c = pl.program_id(0)              # core/split index ("parallel")
    j = pl.program_id(1)              # per-split block step ("arbitrary")
    b = c * steps_per_split + j       # global row-block index

    # Each split owns its own (1, 8, 128) output slabs; init them once.
    @pl.when(j == 0)
    def _():
        sum_ref[0] = jnp.zeros((_SUBLANES, _LANES), jnp.float32)
        cnt_ref[0] = jnp.zeros((_SUBLANES, _LANES), jnp.float32)

    def accumulate(row_mask=None):
        x = preds_ref[...].astype(jnp.float32)
        y = labels_ref[...].astype(jnp.float32)
        valid = y != jnp.float32(ignore_index)
        if row_mask is not None:
            valid = valid & row_mask
        # jnp.where (not multiply-by-mask) so garbage rows cannot inject NaN/Inf.
        bce = jnp.where(valid, _bce_with_logits(x, y), 0.0)
        cnt = valid.astype(jnp.float32)
        # Fold the (block_rows,128) tile into the (8,128) accumulators with
        # element-wise (VPU) adds only; cross-lane reduce deferred to wrapper.
        sum_ref[0] += bce.reshape(block_rows // _SUBLANES, _SUBLANES, _LANES).sum(axis=0)
        cnt_ref[0] += cnt.reshape(block_rows // _SUBLANES, _SUBLANES, _LANES).sum(axis=0)

    last = total_blocks - 1
    if not ragged and not has_pad_steps:
        # Hot path (also the common case): no iota, no pl.when gate.
        accumulate()
    elif not ragged:
        # Some grid points are padding (clamped index_map); skip their work.
        @pl.when(b <= last)
        def _():
            accumulate()
    else:
        @pl.when(b < last)
        def _():
            accumulate()

        # Only the ragged last block pays for the row mask.
        @pl.when(b == last)
        def _():
            row_idx = lax.broadcasted_iota(jnp.int32, (block_rows, _LANES), 0)
            accumulate((row_idx + last * block_rows) < rows)


def focal_loss_v1(preds, labels, *, alpha=ALPHA, gamma=GAMMA,
                  ignore_index=IGNORE_INDEX):
    """Scalar focal loss; preds/labels are same-shape arrays (NCHW ok).

    Inputs are passed through in their native dtype (bf16 stays bf16 on the
    wire); the kernel upcasts in-register to f32.
    """
    p = jnp.ravel(preds)
    l = jnp.ravel(labels)
    n = p.shape[0]

    n_main = (n // _TILE_ELEMS) * _TILE_ELEMS     # 1024-aligned prefix -> kernel
    total = jnp.float32(0.0)
    count = jnp.float32(0.0)

    if n_main:
        rows = n_main // _LANES                   # multiple of 8
        p2 = p[:n_main].reshape(rows, _LANES)
        l2 = l[:n_main].reshape(rows, _LANES)

        block_rows = min(rows, _MAX_TILE_ROWS)    # full slab for small inputs
        total_blocks = pl.cdiv(rows, block_rows)
        num_splits = _NUM_SPLITS if total_blocks >= _NUM_SPLITS else 1
        steps_per_split = pl.cdiv(total_blocks, num_splits)
        ragged = (rows % block_rows) != 0
        has_pad_steps = num_splits * steps_per_split != total_blocks

        if has_pad_steps:
            def in_map(c, j):
                return (jnp.minimum(c * steps_per_split + j, total_blocks - 1), 0)
        else:
            def in_map(c, j):
                return (c * steps_per_split + j, 0)

        kernel = functools.partial(
            _focal_partial_kernel, ignore_index=ignore_index, rows=rows,
            block_rows=block_rows, total_blocks=total_blocks,
            steps_per_split=steps_per_split, ragged=ragged,
            has_pad_steps=has_pad_steps)

        sums, cnts = pl.pallas_call(
            kernel,
            out_shape=(
                jax.ShapeDtypeStruct((num_splits, _SUBLANES, _LANES), jnp.float32),
                jax.ShapeDtypeStruct((num_splits, _SUBLANES, _LANES), jnp.float32),
            ),
            grid_spec=pltpu.PrefetchScalarGridSpec(
                num_scalar_prefetch=0,
                grid=(num_splits, steps_per_split),
                in_specs=[
                    pl.BlockSpec((block_rows, _LANES), in_map),
                    pl.BlockSpec((block_rows, _LANES), in_map),
                ],
                out_specs=(
                    pl.BlockSpec((1, _SUBLANES, _LANES), lambda c, j: (c, 0, 0)),
                    pl.BlockSpec((1, _SUBLANES, _LANES), lambda c, j: (c, 0, 0)),
                ),
            ),
            compiler_params=pltpu.CompilerParams(
                dimension_semantics=("parallel", "arbitrary"),
                vmem_limit_bytes=32 << 20),
        )(p2, l2)
        total = total + jnp.sum(sums)
        count = count + jnp.sum(cnts)

    if n_main < n:
        # <=1023-element unaligned tail: tiny plain-JAX reduction, no full-array
        # pad copy; folded into the kernel's (sum, count) partials.
        p_t = p[n_main:].astype(jnp.float32)
        l_t = l[n_main:].astype(jnp.float32)
        mask_t = l_t != jnp.float32(ignore_index)
        bce_t = jnp.where(mask_t, _bce_with_logits(p_t, l_t), 0.0)
        total = total + jnp.sum(bce_t)
        count = count + jnp.sum(mask_t.astype(jnp.float32))

    # Note: count == 0 (every element ignored) yields NaN, matching PyTorch.
    mean_bce = total / count
    logpt = -mean_bce
    pt = jnp.exp(logpt)
    one_minus_pt = 1.0 - pt
    if gamma == 2.0:
        focal = one_minus_pt * one_minus_pt
    else:
        focal = one_minus_pt ** gamma
    return -focal * alpha * logpt


def _reference(preds, labels, *, alpha=ALPHA, gamma=GAMMA,
               ignore_index=IGNORE_INDEX):
    p = jnp.ravel(preds).astype(jnp.float32)
    l = jnp.ravel(labels).astype(jnp.float32)
    mask = l != ignore_index
    bce = jnp.maximum(p, 0.0) - p * l + jnp.log1p(jnp.exp(-jnp.abs(p)))
    mean_bce = jnp.sum(jnp.where(mask, bce, 0.0)) / jnp.sum(mask)
    logpt = -mean_bce
    pt = jnp.exp(logpt)
    return -((1.0 - pt) ** gamma) * alpha * logpt


if __name__ == "__main__":
    key = jax.random.PRNGKey(0)
    k1, k2 = jax.random.split(key)

    # NCHW inputs, as the PyTorch module would receive.
    preds = jax.random.normal(k1, (2, 4, 16, 16), dtype=jnp.float32)
    labels = jax.random.uniform(k2, (2, 4, 16, 16), dtype=jnp.float32)

    loss = focal_loss_v1(preds, labels)
    loss = jax.block_until_ready(loss)

    ref = jax.block_until_ready(_reference(preds, labels))
    assert jnp.allclose(loss, ref, rtol=1e-5, atol=1e-6), (loss, ref)

    print("KERNEL_OK")
</pallas_src>

<mosaic_0001>
module attributes {stable_mosaic.version = 11 : i64} {
  func.func @_focal_partial_kernel(%arg0: i32, %arg1: i32, %arg2: memref<16x128xf32, #tpu.memory_space<vmem>>, %arg3: memref<16x128xf32, #tpu.memory_space<vmem>>, %arg4: memref<1x8x128xf32, #tpu.memory_space<vmem>>, %arg5: memref<1x8x128xf32, #tpu.memory_space<vmem>>) attributes {dimension_semantics = [#tpu.dimension_semantics<parallel>, #tpu.dimension_semantics<arbitrary>], iteration_bounds = array<i64: 1, 1>, scalar_prefetch = 0 : i64, scratch_operands = 0 : i64, tpu.core_type = #tpu.core_type<tc>, window_params = [{transform_indices = @transform_0, window_bounds = array<i64: 16, 128>}, {transform_indices = @transform_1, window_bounds = array<i64: 16, 128>}, {transform_indices = @transform_2, window_bounds = array<i64: 1, 8, 128>}, {transform_indices = @transform_3, window_bounds = array<i64: 1, 8, 128>}]} {
    %c0_i32 = arith.constant 0 : i32
    %0 = arith.cmpi eq, %arg1, %c0_i32 : i32
    %1 = arith.extui %0 : i1 to i32
    %c0_i32_0 = arith.constant 0 : i32
    %2 = arith.cmpi ne, %1, %c0_i32_0 : i32
    scf.if %2 {
      %cst_21 = arith.constant 0.000000e+00 : f32
      %37 = vector.broadcast %cst_21 : f32 to vector<8x128xf32>
      %c0_22 = arith.constant 0 : index
      %c0_23 = arith.constant 0 : index
      %c0_24 = arith.constant 0 : index
      %38 = vector.load %arg4[%c0_22, %c0_23, %c0_24] : memref<1x8x128xf32, #tpu.memory_space<vmem>>, vector<1x8x128xf32>
      %39 = vector.shape_cast %38 : vector<1x8x128xf32> to vector<8x128xf32>
      %40 = vector.shape_cast %37 : vector<8x128xf32> to vector<1x8x128xf32>
      tpu.vector_store %arg4[%c0_22, %c0_23, %c0_24], %40 {strides = array<i32>} : memref<1x8x128xf32, #tpu.memory_space<vmem>>, vector<1x8x128xf32>,
      %cst_25 = arith.constant 0.000000e+00 : f32
      %41 = vector.broadcast %cst_25 : f32 to vector<8x128xf32>
      %c0_26 = arith.constant 0 : index
      %c0_27 = arith.constant 0 : index
      %c0_28 = arith.constant 0 : index
      %42 = vector.load %arg5[%c0_26, %c0_27, %c0_28] : memref<1x8x128xf32, #tpu.memory_space<vmem>>, vector<1x8x128xf32>
      %43 = vector.shape_cast %42 : vector<1x8x128xf32> to vector<8x128xf32>
      %44 = vector.shape_cast %41 : vector<8x128xf32> to vector<1x8x128xf32>
      tpu.vector_store %arg5[%c0_26, %c0_27, %c0_28], %44 {strides = array<i32>} : memref<1x8x128xf32, #tpu.memory_space<vmem>>, vector<1x8x128xf32>,
    } else {
    }
    %c0 = arith.constant 0 : index
    %c0_1 = arith.constant 0 : index
    %3 = vector.load %arg2[%c0, %c0_1] : memref<16x128xf32, #tpu.memory_space<vmem>>, vector<16x128xf32>
    %c0_2 = arith.constant 0 : index
    %c0_3 = arith.constant 0 : index
    %4 = vector.load %arg3[%c0_2, %c0_3] : memref<16x128xf32, #tpu.memory_space<vmem>>, vector<16x128xf32>
    %cst = arith.constant -1.000000e+02 : f32
    %5 = vector.broadcast %cst : f32 to vector<16x128xf32>
    %6 = arith.cmpf one, %4, %5 : vector<16x128xf32>
    %cst_4 = arith.constant 0.000000e+00 : f32
    %7 = vector.broadcast %cst_4 : f32 to vector<16x128xf32>
    %8 = arith.maximumf %3, %7 : vector<16x128xf32>
    %9 = arith.mulf %3, %4 : vector<16x128xf32>
    %10 = arith.subf %8, %9 : vector<16x128xf32>
    %11 = math.absf %3 : vector<16x128xf32>
    %cst_5 = arith.constant 0.000000e+00 : f32
    %12 = vector.broadcast %cst_5 : f32 to vector<16x128xf32>
    %13 = arith.subf %12, %11 : vector<16x128xf32>
    %14 = math.exp %13 : vector<16x128xf32>
    %15 = math.log1p %14 : vector<16x128xf32>
    %16 = arith.addf %10, %15 : vector<16x128xf32>
    %cst_6 = arith.constant 0.000000e+00 : f32
    %17 = vector.broadcast %cst_6 : f32 to vector<16x128xf32>
    %18 = arith.select %6, %16, %17 : vector<16x128xi1>, vector<16x128xf32>
    %19 = arith.extui %6 : vector<16x128xi1> to vector<16x128xi32>
    %20 = arith.sitofp %19 : vector<16x128xi32> to vector<16x128xf32>
    %c0_7 = arith.constant 0 : index
    %c0_8 = arith.constant 0 : index
    %c0_9 = arith.constant 0 : index
    %21 = vector.load %arg4[%c0_7, %c0_8, %c0_9] : memref<1x8x128xf32, #tpu.memory_space<vmem>>, vector<1x8x128xf32>
    %22 = vector.shape_cast %21 : vector<1x8x128xf32> to vector<8x128xf32>
    %23 = vector.shape_cast %18 : vector<16x128xf32> to vector<2x8x128xf32>
    %cst_10 = arith.constant dense<0.000000e+00> : vector<8x128xf32>
    %24 = vector.multi_reduction <add>, %23, %cst_10 [0] : vector<2x8x128xf32> to vector<8x128xf32>
    %25 = arith.addf %22, %24 : vector<8x128xf32>
    %c0_11 = arith.constant 0 : index
    %c0_12 = arith.constant 0 : index
    %c0_13 = arith.constant 0 : index
    %26 = vector.load %arg4[%c0_11, %c0_12, %c0_13] : memref<1x8x128xf32, #tpu.memory_space<vmem>>, vector<1x8x128xf32>
    %27 = vector.shape_cast %26 : vector<1x8x128xf32> to vector<8x128xf32>
    %28 = vector.shape_cast %25 : vector<8x128xf32> to vector<1x8x128xf32>
    tpu.vector_store %arg4[%c0_11, %c0_12, %c0_13], %28 {strides = array<i32>} : memref<1x8x128xf32, #tpu.memory_space<vmem>>, vector<1x8x128xf32>,
    %c0_14 = arith.constant 0 : index
    %c0_15 = arith.constant 0 : index
    %c0_16 = arith.constant 0 : index
    %29 = vector.load %arg5[%c0_14, %c0_15, %c0_16] : memref<1x8x128xf32, #tpu.memory_space<vmem>>, vector<1x8x128xf32>
    %30 = vector.shape_cast %29 : vector<1x8x128xf32> to vector<8x128xf32>
    %31 = vector.shape_cast %20 : vector<16x128xf32> to vector<2x8x128xf32>
    %cst_17 = arith.constant dense<0.000000e+00> : vector<8x128xf32>
    %32 = vector.multi_reduction <add>, %31, %cst_17 [0] : vector<2x8x128xf32> to vector<8x128xf32>
    %33 = arith.addf %30, %32 : vector<8x128xf32>
    %c0_18 = arith.constant 0 : index
    %c0_19 = arith.constant 0 : index
    %c0_20 = arith.constant 0 : index
    %34 = vector.load %arg5[%c0_18, %c0_19, %c0_20] : memref<1x8x128xf32, #tpu.memory_space<vmem>>, vector<1x8x128xf32>
    %35 = vector.shape_cast %34 : vector<1x8x128xf32> to vector<8x128xf32>
    %36 = vector.shape_cast %33 : vector<8x128xf32> to vector<1x8x128xf32>
    tpu.vector_store %arg5[%c0_18, %c0_19, %c0_20], %36 {strides = array<i32>} : memref<1x8x128xf32, #tpu.memory_space<vmem>>, vector<1x8x128xf32>,
    return
  }
  func.func @transform_0(%arg0: i32, %arg1: i32) -> (i32, i32) {
    %c1_i32 = arith.constant 1 : i32
    %0 = arith.muli %arg0, %c1_i32 : i32
    %1 = arith.addi %0, %arg1 : i32
    %c0_i32 = arith.constant 0 : i32
    %c0_i32_0 = arith.constant 0 : i32
    return %1, %c0_i32 : i32, i32
  }
  func.func @transform_1(%arg0: i32, %arg1: i32) -> (i32, i32) {
    %c1_i32 = arith.constant 1 : i32
    %0 = arith.muli %arg0, %c1_i32 : i32
    %1 = arith.addi %0, %arg1 : i32
    %c0_i32 = arith.constant 0 : i32
    %c0_i32_0 = arith.constant 0 : i32
    return %1, %c0_i32 : i32, i32
  }
  func.func @transform_2(%arg0: i32, %arg1: i32) -> (i32, i32, i32) {
    %c0_i32 = arith.constant 0 : i32
    %c0_i32_0 = arith.constant 0 : i32
    %c0_i32_1 = arith.constant 0 : i32
    return %arg0, %c0_i32, %c0_i32_0 : i32, i32, i32
  }
  func.func @transform_3(%arg0: i32, %arg1: i32) -> (i32, i32, i32) {
    %c0_i32 = arith.constant 0 : i32
    %c0_i32_0 = arith.constant 0 : i32
    %c0_i32_1 = arith.constant 0 : i32
    return %arg0, %c0_i32, %c0_i32_0 : i32, i32, i32
  }
}

</mosaic_0001>

<llo_original>
// kernel: tpu_custom_call.1
$region0: #{tpu_custom_call.1}
  #allocation0 [shape = 'u32[]', space=smem, size = 0x4, offset = 0x4, fixed_abs, tag = 'smem constant byte address 0x4 - core index']
  #allocation1 [shape = 'u32[144,128]{1,0:T(1,128)}', space=vmem, size = 0x12000, scoped, tag = 'internal scratch']
  %s0 = inlined_call_operand.hbm [shape: f32[16,128], index: 0, kind: input, shape index: {}]
  %s1 = inlined_call_operand.hbm [shape: f32[16,128], index: 1, kind: input, shape index: {}]
  %s2 = inlined_call_operand.hbm [shape: f32[1,8,128], index: 2, kind: output, shape index: {0}]
  %s3 = inlined_call_operand.hbm [shape: f32[1,8,128], index: 3, kind: output, shape index: {1}]
  %4 = xla_tuple %s2, %s3
  %s5 = sld [smem:[#allocation0]]
  $region38: #{tpu_custom_call.1} parent=0
    _
  %s7 = ssub.s32 1, %s5
  %s8 = scalar_select 0, %s7, %s5
  $region1: #{tpu_custom_call.1} parent=0
    #allocation2 [shape = 'u8[8192]{0}', space=vmem, size = 0x2000, scoped, tag = 'input window, operand 0, single buffered']
    #allocation3 [shape = 's32[1]{0}', space=sflag, size = 0x4, scoped, tag = 'scoped memory for tpu_custom_call.1']
    #allocation4 [shape = 's32[1]{0}', space=sflag, size = 0x4, scoped, tag = 'scoped memory for tpu_custom_call.1']
    #allocation5 [shape = 'u8[8192]{0}', space=vmem, size = 0x2000, scoped, tag = 'input window, operand 1, single buffered']
    #allocation6 [shape = 's32[1]{0}', space=sflag, size = 0x4, scoped, tag = 'scoped memory for tpu_custom_call.1']
    #allocation7 [shape = 'u8[4096]{0}', space=vmem, size = 0x1000, scoped, tag = 'output window, operand 0, single buffered']
    #allocation8 [shape = 'u8[4096]{0}', space=vmem, size = 0x1000, scoped, tag = 'output window, operand 1, single buffered']
    #allocation9 [shape = 's32[1]{0}', space=sflag, size = 0x4, scoped, tag = 'scoped memory for tpu_custom_call.1']
    %9 = vsyncpa [#allocation3], 0
    %10 = vsyncpa [#allocation6], 0
    %11 = vsyncpa [#allocation4], 0
    %12 = vsyncpa [#allocation9], 0
    // Predicated region
    $region2: #{tpu_custom_call.1} parent=1 // pred_check
      _
    $region3: #{tpu_custom_call.1} parent=1 // pred_check_branch
      %14 = sbr.rel (0) target = $region5
    $region4: #{tpu_custom_call.1} parent=1 // pred_region
      %s15 = sadd.s32 0, 0
      %s16 = smul.u32 2, %s15
      %s18 = ssub.s32 256, 256
      %19 = vsyncadd [#allocation3], %s18
      %s20 = smul.addr %s16, 128
      %s21 = scalar_lea.hbm %s0, %s20
      %s22 = sshll.u32 [#allocation2], 4
      %s23 = int_to_ptr.vmem [resolvable:$true] %s22
      %28 = dma.hbm_to_vmem [thread:$0]  %s21, 256, %s23, [#allocation3], 128, 128, 8
    $region5: #{tpu_custom_call.1} parent=1 // pred_fallthru
      _
    // Predicated region
    $region6: #{tpu_custom_call.1} parent=1 // pred_check
      _
    $region7: #{tpu_custom_call.1} parent=1 // pred_check_branch
      %30 = sbr.rel (0) target = $region9
    $region8: #{tpu_custom_call.1} parent=1 // pred_region
      %s31 = sadd.s32 0, 0
      %s32 = smul.u32 2, %s31
      %s34 = ssub.s32 256, 256
      %35 = vsyncadd [#allocation6], %s34
      %s36 = smul.addr %s32, 128
      %s37 = scalar_lea.hbm %s1, %s36
      %s38 = sshll.u32 [#allocation5], 4
      %s39 = int_to_ptr.vmem [resolvable:$true] %s38
      %44 = dma.hbm_to_vmem [thread:$0]  %s37, 256, %s39, [#allocation6], 128, 128, 8
    $region9: #{tpu_custom_call.1} parent=1 // pred_fallthru
      _
    // Predicated region
    $region10: #{tpu_custom_call.1} parent=1 // pred_check
      _
    $region11: #{tpu_custom_call.1} parent=1 // pred_check_branch
      %46 = sbr.rel (0) target = $region13
    $region12: #{tpu_custom_call.1} parent=1 // pred_region
      %47 = dma.done [#allocation3], 256
    $region13: #{tpu_custom_call.1} parent=1 // pred_fallthru
      _
    // Predicated region
    $region14: #{tpu_custom_call.1} parent=1 // pred_check
      _
    $region15: #{tpu_custom_call.1} parent=1 // pred_check_branch
      %49 = sbr.rel (0) target = $region17
    $region16: #{tpu_custom_call.1} parent=1 // pred_region
      %50 = dma.done [#allocation6], 256
    $region17: #{tpu_custom_call.1} parent=1 // pred_fallthru
      _
    %s51 = sadd.s32 0, 0
    %s52 = smul.u32 2, %s51
    %s53 = sadd.s32 0, 0
    %s54 = smul.u32 2, %s53
    %p55 = scmp.eq.s32.totalorder 0, 0
    // Predicated region
    $region18: #{tpu_custom_call.1} parent=1 // pred_check
      %p56 = pneg %p55
    $region19: #{tpu_custom_call.1} parent=1 // pred_check_branch
      %58 = sbr.rel (%p56) target = $region21
    $region20: #{tpu_custom_call.1} parent=1 // pred_region
      %59 = vst [vmem:[#allocation7] sm:$0xff] 0.0
      %60 = vst [vmem:[#allocation8] sm:$0xff] 0.0
    $region21: #{tpu_custom_call.1} parent=1 // pred_fallthru
      _
    %v61 = vld [vmem:[#allocation2] sm:$0xff]
    %v62 = vld [vmem:[#allocation2 + $0x8] sm:$0xff]
    %v63 = vld [vmem:[#allocation5] sm:$0xff]
    %v64 = vld [vmem:[#allocation5 + $0x8] sm:$0xff]
    %vm65 = vcmp.ne.f32.partialorder %v63, -100.0
    %vm66 = vcmp.ne.f32.partialorder %v64, -100.0
    %v67 = vmax.f32 %v61, 0.0
    %v68 = vmax.f32 %v62, 0.0
    %v69 = vmul.f32 %v61, %v63
    %v70 = vmul.f32 %v62, %v64
    %v71 = vsub.f32 %v67, %v69
    %v72 = vsub.f32 %v68, %v70
    %v73 = vand.u32 2147483647, %v61
    %v74 = vand.u32 2147483647, %v62
    %v75 = vsub.f32 0.0, %v73
    %v76 = vsub.f32 0.0, %v74
    %v77 = vmul.f32 %v75, 1.442695
    %v78 = vpow.pop %v77
    %v79 = vmul.f32 %v76, 1.442695
    %v80 = vpow.pop %v79
    %v81 = vadd.f32 %v78, 1.0
    %v82 = vlog2.pop %v81
    %v83 = vmul.f32 %v82, 0.6931472
    %v84 = vmul.f32 -0.5, %v78
    %v85 = vadd.f32 %v84, 1.0
    %v86 = vmul.f32 %v85, %v78
    %v87 = vand.u32 2147483647, %v78
    %vm88 = vcmp.lt.f32.partialorder %v87, 0.0004427343
    %v89 = vsel %vm88, %v86, %v83
    %v90 = vadd.f32 %v80, 1.0
    %v91 = vlog2.pop %v90
    %v92 = vmul.f32 %v91, 0.6931472
    %v93 = vmul.f32 -0.5, %v80
    %v94 = vadd.f32 %v93, 1.0
    %v95 = vmul.f32 %v94, %v80
    %v96 = vand.u32 2147483647, %v80
    %vm97 = vcmp.lt.f32.partialorder %v96, 0.0004427343
    %v98 = vsel %vm97, %v95, %v92
    %v99 = vadd.f32 %v71, %v89
    %v100 = vadd.f32 %v72, %v98
    %v101 = vsel %vm65, %v99, 0.0
    %v102 = vsel %vm66, %v100, 0.0
    %v103 = vsel %vm65, 1, 0
    %v104 = vsel %vm66, 1, 0
    %v105 = vcvt.s32.f32 %v103
    %v106 = vcvt.s32.f32 %v104
    %v107 = vld [vmem:[#allocation7] sm:$0xff]
    %v108 = vadd.f32 %v101, %v102
    %v109 = vadd.f32 %v107, %v108
    %110 = vst [vmem:[#allocation7] sm:$0xff] %v109
    %v111 = vld [vmem:[#allocation8] sm:$0xff]
    %v112 = vadd.f32 %v105, %v106
    %v113 = vadd.f32 %v111, %v112
    %114 = vst [vmem:[#allocation8] sm:$0xff] %v113
    // Predicated region
    $region22: #{tpu_custom_call.1} parent=1 // pred_check
      _
    $region23: #{tpu_custom_call.1} parent=1 // pred_check_branch
      %116 = sbr.rel (0) target = $region25
    $region24: #{tpu_custom_call.1} parent=1 // pred_region
      %s118 = ssub.s32 128, 128
      %119 = vsyncadd [#allocation4], %s118
      %s121 = sshll.u32 [#allocation7], 4
      %s122 = int_to_ptr.vmem [resolvable:$true] %s121
      %124 = dma.vmem_to_hbm [thread:$0]  %s122, 128, %s2, [#allocation4]
    $region25: #{tpu_custom_call.1} parent=1 // pred_fallthru
      _
    // Predicated region
    $region26: #{tpu_custom_call.1} parent=1 // pred_check
      _
    $region27: #{tpu_custom_call.1} parent=1 // pred_check_branch
      %126 = sbr.rel (0) target = $region29
    $region28: #{tpu_custom_call.1} parent=1 // pred_region
      %s128 = ssub.s32 128, 128
      %129 = vsyncadd [#allocation9], %s128
      %s131 = sshll.u32 [#allocation8], 4
      %s132 = int_to_ptr.vmem [resolvable:$true] %s131
      %134 = dma.vmem_to_hbm [thread:$0]  %s132, 128, %s3, [#allocation9]
    $region29: #{tpu_custom_call.1} parent=1 // pred_fallthru
      _
    // Predicated region
    $region30: #{tpu_custom_call.1} parent=1 // pred_check
      _
    $region31: #{tpu_custom_call.1} parent=1 // pred_check_branch
      %136 = sbr.rel (0) target = $region33
    $region32: #{tpu_custom_call.1} parent=1 // pred_region
      %137 = dma.done [#allocation4], 128
    $region33: #{tpu_custom_call.1} parent=1 // pred_fallthru
      _
    // Predicated region
    $region34: #{tpu_custom_call.1} parent=1 // pred_check
      _
    $region35: #{tpu_custom_call.1} parent=1 // pred_check_branch
      %139 = sbr.rel (0) target = $region37
    $region36: #{tpu_custom_call.1} parent=1 // pred_region
      %140 = dma.done [#allocation9], 128
    $region37: #{tpu_custom_call.1} parent=1 // pred_fallthru
      _
    %141 = vsyncpa [#allocation3], 1
    %142 = vsyncpa [#allocation6], 1
    %143 = vsyncpa [#allocation4], 1
    %144 = vsyncpa [#allocation9], 1

</llo_original>
